<compile_context>
chip_gen: v5e
topology: v5e:2x2
jax: 0.10.0
libtpu: 0.0.40
codegen_flags: <defaults>
</compile_context>

<pallas_src>
import functools

import jax
import jax.numpy as jnp
from jax.experimental import pallas as pl
from jax.experimental.pallas import tpu as pltpu

BN_EPS = 1e-5
LANE = 128
SUBLANE = 8


def _round_up(x, m):
    return (x + m - 1) // m * m


def _vmem_capacity_bytes():
    """Physical VMEM of the current chip; conservative fallback if unknown."""
    try:
        info = pltpu.get_tpu_info()
        cap = getattr(info, "vmem_capacity_bytes", None)
        if cap:
            return int(cap)
    except Exception:
        pass
    return 64 * 1024 * 1024   # v7x per-core size; safe lower bound everywhere


def _mlp_head_kernel(x_ref, w1_ref, b1_ref, gamma_ref, beta_ref, w2_ref, b2_ref,
                     o_ref, stat0_ref, stat1_ref, *opt_scratch,
                     true_b, eps, cache_h):
    """Two-phase fused MLPHead kernel.

    phase 0: mm = x @ W1 (bf16 MXU, f32 acc); accumulate sum / sum-of-squares
             of mm (pre-bias -> padded rows are exact zeros, no masking) into
             VMEM scratch; optionally cache h = mm + b1 in a full-batch VMEM
             scratch so the matmul is not recomputed.
    phase 1: fold global BN into one scale/shift, then
             out = relu(h * scale + shift) @ W2 + b2.
    """
    ph = pl.program_id(0)
    bt = pl.program_id(1)
    h_cache_ref = opt_scratch[0] if cache_h else None

    @pl.when(ph == 0)
    def _stats_pass():
        @pl.when(bt == 0)
        def _init():
            stat0_ref[...] = jnp.zeros_like(stat0_ref)
            stat1_ref[...] = jnp.zeros_like(stat1_ref)

        mm = jnp.dot(x_ref[...].astype(jnp.bfloat16), w1_ref[...],
                     preferred_element_type=jnp.float32)
        # Pre-bias stats: zero-padded batch rows contribute exactly zero, so
        # no row masking is required; dividing by the true batch size later
        # yields the correct mean / variance.
        stat0_ref[...] += jnp.sum(mm, axis=0, keepdims=True)
        stat1_ref[...] += jnp.sum(mm * mm, axis=0, keepdims=True)
        if cache_h:
            h_cache_ref[bt] = mm + b1_ref[...]
        # NOTE: o_ref is intentionally NOT written in phase 0; its block index
        # stays at 0 for the whole phase, so no HBM writeback happens here.

    @pl.when(ph == 1)
    def _output_pass():
        @pl.when(bt == 0)
        def _finalize_stats():
            # Fold BN into one scale/shift pair (reuses the stats scratch).
            inv_b = 1.0 / float(true_b)
            mean_mm = stat0_ref[...] * inv_b
            var = jnp.maximum(stat1_ref[...] * inv_b - mean_mm * mean_mm, 0.0)
            scale = gamma_ref[...] * jax.lax.rsqrt(var + eps)
            stat0_ref[...] = scale
            stat1_ref[...] = beta_ref[...] - (mean_mm + b1_ref[...]) * scale

        if cache_h:
            h = h_cache_ref[bt]
        else:
            h = jnp.dot(x_ref[...].astype(jnp.bfloat16), w1_ref[...],
                        preferred_element_type=jnp.float32) + b1_ref[...]
        h = jnp.maximum(h * stat0_ref[...] + stat1_ref[...], 0.0)  # BN + ReLU (f32)
        o_ref[...] = (jnp.dot(h.astype(jnp.bfloat16), w2_ref[...],
                              preferred_element_type=jnp.float32)
                      + b2_ref[...]).astype(o_ref.dtype)


def mlp_head(x, w1, b1, gamma, beta, w2, b2, *, block_b=None, cache_hidden=None):
    """x: (B, D) f32; w1: (D, H); b1/gamma/beta: (1, H); w2: (H, P); b2: (1, P)."""
    B, D = x.shape
    H = w1.shape[1]
    P = w2.shape[1]

    Dp = _round_up(D, LANE)
    Hp = _round_up(H, LANE)
    Pp = _round_up(P, LANE)

    # Batch tile: big tiles amortize the ~0.35us per-grid-step overhead and
    # keep the MXU M-dim full; small batches round up to 16 rows (bf16 packing).
    if block_b is None:
        if B >= 512:
            block_b = 512
        elif B >= 256:
            block_b = 256
        else:
            block_b = _round_up(max(B, SUBLANE), 2 * SUBLANE)
    tb = block_b
    Bp = _round_up(B, tb)
    nbt = Bp // tb

    # x stays f32 (cast to bf16 inside the kernel); pad only if needed.
    if Bp != B or Dp != D:
        xp = jnp.pad(x, ((0, Bp - B), (0, Dp - D)))
    else:
        xp = x
    # Weights cast to bf16 once (halves resident VMEM); biases/BN stay f32.
    w1b = jnp.pad(w1.astype(jnp.bfloat16), ((0, Dp - D), (0, Hp - H)))
    w2b = jnp.pad(w2.astype(jnp.bfloat16), ((0, Hp - H), (0, Pp - P)))
    b1p = jnp.pad(b1.astype(jnp.float32), ((0, 0), (0, Hp - H)))
    gammap = jnp.pad(gamma.astype(jnp.float32), ((0, 0), (0, Hp - H)))
    betap = jnp.pad(beta.astype(jnp.float32), ((0, 0), (0, Pp - P) if False else (0, Hp - H)))
    b2p = jnp.pad(b2.astype(jnp.float32), ((0, 0), (0, Pp - P)))

    # --- VMEM budget (generation-aware) -----------------------------------
    vmem_cap = int(0.87 * _vmem_capacity_bytes())
    # Pallas double-buffers inputs even with grid-invariant index maps.
    weight_bytes = Dp * Hp * 2 + Hp * Pp * 2 + (3 * Hp + Pp) * 4
    resident = 2 * weight_bytes
    streamed = 2 * tb * Dp * 4 + 2 * tb * Pp * 4       # x (f32) + out tiles
    stats = 2 * Hp * 4
    working = 2 * tb * Hp * 4                           # in-flight f32 temps
    base = resident + streamed + stats + working
    cache_bytes = Bp * Hp * 4                           # full-batch h cache (f32)

    if cache_hidden is None:
        cache_h = int(1.15 * (base + cache_bytes)) <= vmem_cap
    else:
        cache_h = bool(cache_hidden)
    need = base + (cache_bytes if cache_h else 0)
    vmem_limit = min(vmem_cap, max(4 * 1024 * 1024, int(1.25 * need)))

    # --- Block specs --------------------------------------------------------
    inv = lambda ph, bti: (0, 0)                    # grid-invariant, VMEM resident
    if cache_h:
        # Phase 0 walks batch tiles; phase 1 pins the last-fetched block so no
        # new x DMAs are issued while reading h from the cache.
        x_map = lambda ph, bti: (bti * (1 - ph) + (nbt - 1) * ph, 0)
    else:
        x_map = lambda ph, bti: (bti, 0)            # recompute fallback: re-walk x
    # Output: revisit block 0 for all of phase 0 (no writeback / no zero fill),
    # write real tiles in phase 1 only.
    out_map = lambda ph, bti: (bti * ph, 0)

    scratch_shapes = [pltpu.VMEM((1, Hp), jnp.float32),    # sum(mm)   -> scale
                      pltpu.VMEM((1, Hp), jnp.float32)]    # sum(mm^2) -> shift
    if cache_h:
        scratch_shapes.append(pltpu.VMEM((nbt, tb, Hp), jnp.float32))  # h cache

    flops = (1 if cache_h else 2) * 2 * Bp * Dp * Hp + 2 * Bp * Hp * Pp
    bytes_accessed = ((1 if cache_h else 2) * Bp * Dp * 4
                      + Dp * Hp * 2 + Hp * Pp * 2
                      + (3 * Hp + Pp) * 4 + Bp * Pp * 4)

    kernel = functools.partial(_mlp_head_kernel, true_b=B, eps=BN_EPS,
                               cache_h=cache_h)
    out = pl.pallas_call(
        kernel,
        out_shape=jax.ShapeDtypeStruct((Bp, Pp), jnp.float32),
        grid=(2, nbt),
        in_specs=[
            pl.BlockSpec((tb, Dp), x_map),      # x (f32, cast in-kernel)
            pl.BlockSpec((Dp, Hp), inv),        # W1 (bf16)
            pl.BlockSpec((1, Hp), inv),         # b1
            pl.BlockSpec((1, Hp), inv),         # gamma
            pl.BlockSpec((1, Hp), inv),         # beta
            pl.BlockSpec((Hp, Pp), inv),        # W2 (bf16)
            pl.BlockSpec((1, Pp), inv),         # b2
        ],
        out_specs=pl.BlockSpec((tb, Pp), out_map),
        scratch_shapes=scratch_shapes,
        compiler_params=pltpu.CompilerParams(
            # Both axes carry the cross-tile global-BN-stats dependency, so
            # they must run sequentially on one core.
            dimension_semantics=("arbitrary", "arbitrary"),
            vmem_limit_bytes=vmem_limit),
        cost_estimate=pl.CostEstimate(flops=flops, transcendentals=Hp,
                                      bytes_accessed=bytes_accessed),
    )(xp, w1b, b1p, gammap, betap, w2b, b2p)
    return out[:B, :P]


def init_params(key, in_channels, mlp_hidden_size, projection_size):
    """Deterministic PyTorch-style (Kaiming-uniform-ish) init."""
    k1, k2, k3, k4 = jax.random.split(key, 4)
    bound1 = 1.0 / jnp.sqrt(in_channels)
    bound2 = 1.0 / jnp.sqrt(mlp_hidden_size)
    w1 = jax.random.uniform(k1, (in_channels, mlp_hidden_size),
                            jnp.float32, -bound1, bound1)
    b1 = jax.random.uniform(k2, (1, mlp_hidden_size),
                            jnp.float32, -bound1, bound1)
    gamma = jnp.ones((1, mlp_hidden_size), jnp.float32)
    beta = jnp.zeros((1, mlp_hidden_size), jnp.float32)
    w2 = jax.random.uniform(k3, (mlp_hidden_size, projection_size),
                            jnp.float32, -bound2, bound2)
    b2 = jax.random.uniform(k4, (1, projection_size),
                            jnp.float32, -bound2, bound2)
    return w1, b1, gamma, beta, w2, b2


def mlp_head_ref(x, w1, b1, gamma, beta, w2, b2):
    """Pure-f32 JAX reference with PyTorch MLPHead (training-mode BN) semantics."""
    h = x @ w1 + b1
    mean = jnp.mean(h, axis=0, keepdims=True)
    var = jnp.mean((h - mean) ** 2, axis=0, keepdims=True)   # biased, like BN
    h = (h - mean) / jnp.sqrt(var + BN_EPS) * gamma + beta
    h = jnp.maximum(h, 0.0)
    return h @ w2 + b2


def mlp_head_ref_bf16(x, w1, b1, gamma, beta, w2, b2):
    """Reference mirroring the kernel arithmetic (bf16 matmuls, pre-bias stats)."""
    mm = jnp.dot(x.astype(jnp.bfloat16), w1.astype(jnp.bfloat16),
                 preferred_element_type=jnp.float32)
    mean_mm = jnp.mean(mm, axis=0, keepdims=True)
    var = jnp.maximum(jnp.mean(mm * mm, axis=0, keepdims=True) - mean_mm ** 2, 0.0)
    scale = gamma * jax.lax.rsqrt(var + BN_EPS)
    shift = beta - (mean_mm + b1) * scale
    h = jnp.maximum((mm + b1) * scale + shift, 0.0)
    return jnp.dot(h.astype(jnp.bfloat16), w2.astype(jnp.bfloat16),
                   preferred_element_type=jnp.float32) + b2


if __name__ == "__main__":
    def check(B, D, H, P, key, tol_f32, cache_hidden=None):
        kx, kp = jax.random.split(key)
        x = jax.random.normal(kx, (B, D), jnp.float32)
        params = init_params(kp, D, H, P)

        out = jax.block_until_ready(
            mlp_head(x, *params, cache_hidden=cache_hidden))
        assert out.shape == (B, P)

        ref_tight = mlp_head_ref_bf16(x, *params)   # same arithmetic as kernel
        ref_f32 = mlp_head_ref(x, *params)          # PyTorch f32 semantics
        assert jnp.allclose(out, ref_tight, atol=5e-3, rtol=5e-3), \
            "mismatch vs bf16-matched reference"
        assert jnp.allclose(out, ref_f32, atol=tol_f32, rtol=tol_f32), \
            "mismatch vs f32 reference"

    key = jax.random.PRNGKey(0)
    k1, k2, k3 = jax.random.split(key, 3)

    # Small shapes from the MLPHead spec: batch=8, in=32, hidden=64, proj=16.
    check(8, 32, 64, 16, k1, tol_f32=5e-2)
    # Larger shape exercising batch tiling (2 tiles), padding, h-cache path.
    check(500, 200, 192, 96, k2, tol_f32=1e-1)
    # Force the recompute fallback path (no h cache) to keep it exercised.
    check(300, 160, 128, 64, k3, tol_f32=1e-1, cache_hidden=False)

    print("KERNEL_OK")
</pallas_src>

<mosaic_0001>
module attributes {stable_mosaic.version = 11 : i64} {
  func.func @_mlp_head_kernel(%arg0: i32, %arg1: i32, %arg2: memref<16x128xf32, #tpu.memory_space<vmem>>, %arg3: memref<128x128xbf16, #tpu.memory_space<vmem>>, %arg4: memref<1x128xf32, #tpu.memory_space<vmem>>, %arg5: memref<1x128xf32, #tpu.memory_space<vmem>>, %arg6: memref<1x128xf32, #tpu.memory_space<vmem>>, %arg7: memref<128x128xbf16, #tpu.memory_space<vmem>>, %arg8: memref<1x128xf32, #tpu.memory_space<vmem>>, %arg9: memref<16x128xf32, #tpu.memory_space<vmem>>, %arg10: memref<1x128xf32, #tpu.memory_space<vmem>>, %arg11: memref<1x128xf32, #tpu.memory_space<vmem>>, %arg12: memref<1x16x128xf32, #tpu.memory_space<vmem>>) attributes {dimension_semantics = [#tpu.dimension_semantics<arbitrary>, #tpu.dimension_semantics<arbitrary>], iteration_bounds = array<i64: 2, 1>, scalar_prefetch = 0 : i64, scratch_operands = 3 : i64, tpu.core_type = #tpu.core_type<tc>, window_params = [{transform_indices = @transform_0, window_bounds = array<i64: 16, 128>}, {pipeline_mode = #tpu.pipeline_mode<synchronous>, transform_indices = @transform_1, window_bounds = array<i64: 128, 128>}, {pipeline_mode = #tpu.pipeline_mode<synchronous>, transform_indices = @transform_2, window_bounds = array<i64: 1, 128>}, {pipeline_mode = #tpu.pipeline_mode<synchronous>, transform_indices = @transform_3, window_bounds = array<i64: 1, 128>}, {pipeline_mode = #tpu.pipeline_mode<synchronous>, transform_indices = @transform_4, window_bounds = array<i64: 1, 128>}, {pipeline_mode = #tpu.pipeline_mode<synchronous>, transform_indices = @transform_5, window_bounds = array<i64: 128, 128>}, {pipeline_mode = #tpu.pipeline_mode<synchronous>, transform_indices = @transform_6, window_bounds = array<i64: 1, 128>}, {transform_indices = @transform_7, window_bounds = array<i64: 16, 128>}]} {
    %c0_i32 = arith.constant 0 : i32
    %0 = arith.cmpi eq, %arg0, %c0_i32 : i32
    %1 = arith.extui %0 : i1 to i32
    %c0_i32_0 = arith.constant 0 : i32
    %2 = arith.cmpi ne, %1, %c0_i32_0 : i32
    scf.if %2 {
      %c0_i32_2 = arith.constant 0 : i32
      %6 = arith.cmpi eq, %arg1, %c0_i32_2 : i32
      %7 = arith.extui %6 : i1 to i32
      %c0_i32_3 = arith.constant 0 : i32
      %8 = arith.cmpi ne, %7, %c0_i32_3 : i32
      scf.if %8 {
        %cst_21 = arith.constant 0.000000e+00 : f32
        %31 = vector.broadcast %cst_21 : f32 to vector<1x128xf32>
        %c0_22 = arith.constant 0 : index
        %c0_23 = arith.constant 0 : index
        %32 = vector.load %arg10[%c0_22, %c0_23] : memref<1x128xf32, #tpu.memory_space<vmem>>, vector<1x128xf32>
        tpu.vector_store %arg10[%c0_22, %c0_23], %31 {strides = array<i32>} : memref<1x128xf32, #tpu.memory_space<vmem>>, vector<1x128xf32>,
        %cst_24 = arith.constant 0.000000e+00 : f32
        %33 = vector.broadcast %cst_24 : f32 to vector<1x128xf32>
        %c0_25 = arith.constant 0 : index
        %c0_26 = arith.constant 0 : index
        %34 = vector.load %arg11[%c0_25, %c0_26] : memref<1x128xf32, #tpu.memory_space<vmem>>, vector<1x128xf32>
        tpu.vector_store %arg11[%c0_25, %c0_26], %33 {strides = array<i32>} : memref<1x128xf32, #tpu.memory_space<vmem>>, vector<1x128xf32>,
      } else {
      }
      %c0 = arith.constant 0 : index
      %c0_4 = arith.constant 0 : index
      %9 = vector.load %arg2[%c0, %c0_4] : memref<16x128xf32, #tpu.memory_space<vmem>>, vector<16x128xf32>
      %10 = arith.truncf %9 : vector<16x128xf32> to vector<16x128xbf16>
      %c0_5 = arith.constant 0 : index
      %c0_6 = arith.constant 0 : index
      %11 = vector.load %arg3[%c0_5, %c0_6] : memref<128x128xbf16, #tpu.memory_space<vmem>>, vector<128x128xbf16>
      %cst = arith.constant dense<0.000000e+00> : vector<16x128xf32>
      %12 = tpu.matmul %10, %11, %cst {dimension_numbers = #tpu.dot_dimension_numbers<[1], [0], [0], [1], [0, 0, 1, 1], [], []>} : vector<16x128xbf16>, vector<128x128xbf16>, vector<16x128xf32> -> vector<16x128xf32>
      %c0_7 = arith.constant 0 : index
      %c0_8 = arith.constant 0 : index
      %13 = vector.load %arg10[%c0_7, %c0_8] : memref<1x128xf32, #tpu.memory_space<vmem>>, vector<1x128xf32>
      %cst_9 = arith.constant dense<0.000000e+00> : vector<128xf32>
      %14 = vector.multi_reduction <add>, %12, %cst_9 [0] : vector<16x128xf32> to vector<128xf32>
      %15 = vector.shape_cast %14 : vector<128xf32> to vector<1x128xf32>
      %16 = arith.addf %13, %15 : vector<1x128xf32>
      %c0_10 = arith.constant 0 : index
      %c0_11 = arith.constant 0 : index
      %17 = vector.load %arg10[%c0_10, %c0_11] : memref<1x128xf32, #tpu.memory_space<vmem>>, vector<1x128xf32>
      tpu.vector_store %arg10[%c0_10, %c0_11], %16 {strides = array<i32>} : memref<1x128xf32, #tpu.memory_space<vmem>>, vector<1x128xf32>,
      %c0_12 = arith.constant 0 : index
      %c0_13 = arith.constant 0 : index
      %18 = vector.load %arg11[%c0_12, %c0_13] : memref<1x128xf32, #tpu.memory_space<vmem>>, vector<1x128xf32>
      %19 = arith.mulf %12, %12 : vector<16x128xf32>
      %cst_14 = arith.constant dense<0.000000e+00> : vector<128xf32>
      %20 = vector.multi_reduction <add>, %19, %cst_14 [0] : vector<16x128xf32> to vector<128xf32>
      %21 = vector.shape_cast %20 : vector<128xf32> to vector<1x128xf32>
      %22 = arith.addf %18, %21 : vector<1x128xf32>
      %c0_15 = arith.constant 0 : index
      %c0_16 = arith.constant 0 : index
      %23 = vector.load %arg11[%c0_15, %c0_16] : memref<1x128xf32, #tpu.memory_space<vmem>>, vector<1x128xf32>
      tpu.vector_store %arg11[%c0_15, %c0_16], %22 {strides = array<i32>} : memref<1x128xf32, #tpu.memory_space<vmem>>, vector<1x128xf32>,
      %c0_17 = arith.constant 0 : index
      %c0_18 = arith.constant 0 : index
      %24 = vector.load %arg4[%c0_17, %c0_18] : memref<1x128xf32, #tpu.memory_space<vmem>>, vector<1x128xf32>
      %25 = vector.broadcast %24 : vector<1x128xf32> to vector<16x128xf32>
      %26 = arith.addf %12, %25 : vector<16x128xf32>
      %27 = arith.index_cast %arg1 : i32 to index
      %c0_19 = arith.constant 0 : index
      %c0_20 = arith.constant 0 : index
      %28 = vector.load %arg12[%27, %c0_19, %c0_20] : memref<1x16x128xf32, #tpu.memory_space<vmem>>, vector<1x16x128xf32>
      %29 = vector.shape_cast %28 : vector<1x16x128xf32> to vector<16x128xf32>
      %30 = vector.shape_cast %26 : vector<16x128xf32> to vector<1x16x128xf32>
      tpu.vector_store %arg12[%27, %c0_19, %c0_20], %30 {strides = array<i32>} : memref<1x16x128xf32, #tpu.memory_space<vmem>>, vector<1x16x128xf32>,
    } else {
    }
    %c1_i32 = arith.constant 1 : i32
    %3 = arith.cmpi eq, %arg0, %c1_i32 : i32
    %4 = arith.extui %3 : i1 to i32
    %c0_i32_1 = arith.constant 0 : i32
    %5 = arith.cmpi ne, %4, %c0_i32_1 : i32
    scf.if %5 {
      %c0_i32_2 = arith.constant 0 : i32
      %6 = arith.cmpi eq, %arg1, %c0_i32_2 : i32
      %7 = arith.extui %6 : i1 to i32
      %c0_i32_3 = arith.constant 0 : i32
      %8 = arith.cmpi ne, %7, %c0_i32_3 : i32
      scf.if %8 {
        %c0_16 = arith.constant 0 : index
        %c0_17 = arith.constant 0 : index
        %27 = vector.load %arg10[%c0_16, %c0_17] : memref<1x128xf32, #tpu.memory_space<vmem>>, vector<1x128xf32>
        %cst_18 = arith.constant 1.250000e-01 : f32
        %28 = vector.broadcast %cst_18 : f32 to vector<1x128xf32>
        %29 = arith.mulf %27, %28 : vector<1x128xf32>
        %c0_19 = arith.constant 0 : index
        %c0_20 = arith.constant 0 : index
        %30 = vector.load %arg11[%c0_19, %c0_20] : memref<1x128xf32, #tpu.memory_space<vmem>>, vector<1x128xf32>
        %cst_21 = arith.constant 1.250000e-01 : f32
        %31 = vector.broadcast %cst_21 : f32 to vector<1x128xf32>
        %32 = arith.mulf %30, %31 : vector<1x128xf32>
        %33 = arith.mulf %29, %29 : vector<1x128xf32>
        %34 = arith.subf %32, %33 : vector<1x128xf32>
        %cst_22 = arith.constant 0.000000e+00 : f32
        %35 = vector.broadcast %cst_22 : f32 to vector<1x128xf32>
        %36 = arith.maximumf %34, %35 : vector<1x128xf32>
        %c0_23 = arith.constant 0 : index
        %c0_24 = arith.constant 0 : index
        %37 = vector.load %arg5[%c0_23, %c0_24] : memref<1x128xf32, #tpu.memory_space<vmem>>, vector<1x128xf32>
        %cst_25 = arith.constant 9.99999974E-6 : f32
        %38 = vector.broadcast %cst_25 : f32 to vector<1x128xf32>
        %39 = arith.addf %36, %38 : vector<1x128xf32>
        %40 = math.rsqrt %39 : vector<1x128xf32>
        %41 = arith.mulf %37, %40 : vector<1x128xf32>
        %c0_26 = arith.constant 0 : index
        %c0_27 = arith.constant 0 : index
        %42 = vector.load %arg10[%c0_26, %c0_27] : memref<1x128xf32, #tpu.memory_space<vmem>>, vector<1x128xf32>
        tpu.vector_store %arg10[%c0_26, %c0_27], %41 {strides = array<i32>} : memref<1x128xf32, #tpu.memory_space<vmem>>, vector<1x128xf32>,
        %c0_28 = arith.constant 0 : index
        %c0_29 = arith.constant 0 : index
        %43 = vector.load %arg6[%c0_28, %c0_29] : memref<1x128xf32, #tpu.memory_space<vmem>>, vector<1x128xf32>
        %c0_30 = arith.constant 0 : index
        %c0_31 = arith.constant 0 : index
        %44 = vector.load %arg4[%c0_30, %c0_31] : memref<1x128xf32, #tpu.memory_space<vmem>>, vector<1x128xf32>
        %45 = arith.addf %29, %44 : vector<1x128xf32>
        %46 = arith.mulf %45, %41 : vector<1x128xf32>
        %47 = arith.subf %43, %46 : vector<1x128xf32>
        %c0_32 = arith.constant 0 : index
        %c0_33 = arith.constant 0 : index
        %48 = vector.load %arg11[%c0_32, %c0_33] : memref<1x128xf32, #tpu.memory_space<vmem>>, vector<1x128xf32>
        tpu.vector_store %arg11[%c0_32, %c0_33], %47 {strides = array<i32>} : memref<1x128xf32, #tpu.memory_space<vmem>>, vector<1x128xf32>,
      } else {
      }
      %9 = arith.index_cast %arg1 : i32 to index
      %c0 = arith.constant 0 : index
      %c0_4 = arith.constant 0 : index
      %10 = vector.load %arg12[%9, %c0, %c0_4] : memref<1x16x128xf32, #tpu.memory_space<vmem>>, vector<1x16x128xf32>
      %11 = vector.shape_cast %10 : vector<1x16x128xf32> to vector<16x128xf32>
      %c0_5 = arith.constant 0 : index
      %c0_6 = arith.constant 0 : index
      %12 = vector.load %arg10[%c0_5, %c0_6] : memref<1x128xf32, #tpu.memory_space<vmem>>, vector<1x128xf32>
      %13 = vector.broadcast %12 : vector<1x128xf32> to vector<16x128xf32>
      %14 = arith.mulf %11, %13 : vector<16x128xf32>
      %c0_7 = arith.constant 0 : index
      %c0_8 = arith.constant 0 : index
      %15 = vector.load %arg11[%c0_7, %c0_8] : memref<1x128xf32, #tpu.memory_space<vmem>>, vector<1x128xf32>
      %16 = vector.broadcast %15 : vector<1x128xf32> to vector<16x128xf32>
      %17 = arith.addf %14, %16 : vector<16x128xf32>
      %cst = arith.constant 0.000000e+00 : f32
      %18 = vector.broadcast %cst : f32 to vector<16x128xf32>
      %19 = arith.maximumf %17, %18 : vector<16x128xf32>
      %20 = arith.truncf %19 : vector<16x128xf32> to vector<16x128xbf16>
      %c0_9 = arith.constant 0 : index
      %c0_10 = arith.constant 0 : index
      %21 = vector.load %arg7[%c0_9, %c0_10] : memref<128x128xbf16, #tpu.memory_space<vmem>>, vector<128x128xbf16>
      %cst_11 = arith.constant dense<0.000000e+00> : vector<16x128xf32>
      %22 = tpu.matmul %20, %21, %cst_11 {dimension_numbers = #tpu.dot_dimension_numbers<[1], [0], [0], [1], [0, 0, 1, 1], [], []>} : vector<16x128xbf16>, vector<128x128xbf16>, vector<16x128xf32> -> vector<16x128xf32>
      %c0_12 = arith.constant 0 : index
      %c0_13 = arith.constant 0 : index
      %23 = vector.load %arg8[%c0_12, %c0_13] : memref<1x128xf32, #tpu.memory_space<vmem>>, vector<1x128xf32>
      %24 = vector.broadcast %23 : vector<1x128xf32> to vector<16x128xf32>
      %25 = arith.addf %22, %24 : vector<16x128xf32>
      %c0_14 = arith.constant 0 : index
      %c0_15 = arith.constant 0 : index
      %26 = vector.load %arg9[%c0_14, %c0_15] : memref<16x128xf32, #tpu.memory_space<vmem>>, vector<16x128xf32>
      tpu.vector_store %arg9[%c0_14, %c0_15], %25 {strides = array<i32>} : memref<16x128xf32, #tpu.memory_space<vmem>>, vector<16x128xf32>,
    } else {
    }
    return
  }
  func.func @transform_0(%arg0: i32, %arg1: i32) -> (i32, i32) {
    %c1_i32 = arith.constant 1 : i32
    %0 = arith.subi %c1_i32, %arg0 : i32
    %1 = arith.muli %arg1, %0 : i32
    %c0_i32 = arith.constant 0 : i32
    %2 = arith.muli %c0_i32, %arg0 : i32
    %3 = arith.addi %1, %2 : i32
    %c0_i32_0 = arith.constant 0 : i32
    %c0_i32_1 = arith.constant 0 : i32
    return %3, %c0_i32_0 : i32, i32
  }
  func.func @transform_1(%arg0: i32, %arg1: i32) -> (i32, i32) {
    %c0_i32 = arith.constant 0 : i32
    %c0_i32_0 = arith.constant 0 : i32
    %c0_i32_1 = arith.constant 0 : i32
    return %c0_i32, %c0_i32_0 : i32, i32
  }
  func.func @transform_2(%arg0: i32, %arg1: i32) -> (i32, i32) {
    %c0_i32 = arith.constant 0 : i32
    %c0_i32_0 = arith.constant 0 : i32
    %c0_i32_1 = arith.constant 0 : i32
    return %c0_i32, %c0_i32_0 : i32, i32
  }
  func.func @transform_3(%arg0: i32, %arg1: i32) -> (i32, i32) {
    %c0_i32 = arith.constant 0 : i32
    %c0_i32_0 = arith.constant 0 : i32
    %c0_i32_1 = arith.constant 0 : i32
    return %c0_i32, %c0_i32_0 : i32, i32
  }
  func.func @transform_4(%arg0: i32, %arg1: i32) -> (i32, i32) {
    %c0_i32 = arith.constant 0 : i32
    %c0_i32_0 = arith.constant 0 : i32
    %c0_i32_1 = arith.constant 0 : i32
    return %c0_i32, %c0_i32_0 : i32, i32
  }
  func.func @transform_5(%arg0: i32, %arg1: i32) -> (i32, i32) {
    %c0_i32 = arith.constant 0 : i32
    %c0_i32_0 = arith.constant 0 : i32
    %c0_i32_1 = arith.constant 0 : i32
    return %c0_i32, %c0_i32_0 : i32, i32
  }
  func.func @transform_6(%arg0: i32, %arg1: i32) -> (i32, i32) {
    %c0_i32 = arith.constant 0 : i32
    %c0_i32_0 = arith.constant 0 : i32
    %c0_i32_1 = arith.constant 0 : i32
    return %c0_i32, %c0_i32_0 : i32, i32
  }
  func.func @transform_7(%arg0: i32, %arg1: i32) -> (i32, i32) {
    %0 = arith.muli %arg1, %arg0 : i32
    %c0_i32 = arith.constant 0 : i32
    %c0_i32_0 = arith.constant 0 : i32
    return %0, %c0_i32 : i32, i32
  }
}

</mosaic_0001>

<llo_original>
// kernel: tpu_custom_call.1
$region0: #{tpu_custom_call.1}
  #allocation0 [shape = 'u32[]', space=smem, size = 0x4, offset = 0x4, fixed_abs, tag = 'smem constant byte address 0x4 - core index']
  #allocation1 [shape = 'u32[72,128]{1,0:T(1,128)}', space=vmem, size = 0x9000, scoped, tag = 'internal scratch']
  #allocation2 [shape = 'f32[1,128]{1,0:T(1,128)}', space=vmem, size = 0x200, scoped, tag = 'scratch operand']
  #allocation3 [shape = 'f32[1,128]{1,0:T(1,128)}', space=vmem, size = 0x200, scoped, tag = 'scratch operand']
  #allocation4 [shape = 'f32[1,16,128]{2,1,0:T(8,128)}', space=vmem, size = 0x2000, scoped, tag = 'scratch operand']
  %s0 = inlined_call_operand.hbm [shape: f32[16,128], index: 0, kind: input, shape index: {}]
  %s1 = inlined_call_operand.hbm [shape: bf16[128,128], index: 1, kind: input, shape index: {}]
  %s2 = inlined_call_operand.vmem [shape: f32[1,128], index: 2, kind: input, shape index: {}]
  %s3 = inlined_call_operand.vmem [shape: f32[1,128], index: 3, kind: input, shape index: {}]
  %s4 = inlined_call_operand.vmem [shape: f32[1,128], index: 4, kind: input, shape index: {}]
  %s5 = inlined_call_operand.hbm [shape: bf16[128,128], index: 5, kind: input, shape index: {}]
  %s6 = inlined_call_operand.vmem [shape: f32[1,128], index: 6, kind: input, shape index: {}]
  %s7 = inlined_call_operand.hbm [shape: f32[16,128], index: 7, kind: output, shape index: {}]
  %s8 = sld [smem:[#allocation0]]
  $region89: #{tpu_custom_call.1} parent=0
    _
  %s10 = ssub.s32 1, %s8
  %s11 = scalar_select 0, %s10, %s8
  $region1: #{tpu_custom_call.1} parent=0
    #allocation5 [shape = 'u8[16384]{0}', space=vmem, size = 0x4000, scoped, tag = 'input window, operand 0']
    #allocation6 [shape = 's32[2]{0}', space=sflag, size = 0x8, scoped, tag = 'scoped memory for tpu_custom_call.1']
    #allocation7 [shape = 's32[2]{0}', space=sflag, size = 0x8, scoped, tag = 'scoped memory for tpu_custom_call.1']
    #allocation8 [shape = 'u8[32768]{0}', space=vmem, size = 0x8000, scoped, tag = 'input window, operand 1, single buffered']
    #allocation9 [shape = 's32[1]{0}', space=sflag, size = 0x4, scoped, tag = 'scoped memory for tpu_custom_call.1']
    #allocation10 [shape = 'u8[32768]{0}', space=vmem, size = 0x8000, scoped, tag = 'input window, operand 5, single buffered']
    #allocation11 [shape = 'u8[16384]{0}', space=vmem, size = 0x4000, scoped, tag = 'output window, operand 0']
    %12 = vsyncpa [#allocation6], 0
    %s13 = scalar_lea.sflag [#allocation6], 1
    %14 = vsyncpa %s13, 0
    %15 = vsyncpa [#allocation9], 0
    %16 = vsyncpa [#allocation7], 0
    %s17 = scalar_lea.sflag [#allocation7], 1
    %18 = vsyncpa %s17, 0
    loop: start=0, step=1, limit=4
    $region2: #{tpu_custom_call.1} parent=1 // loop_pre_header
      _
    $region3: #{tpu_custom_call.1} parent=1 // loop_header
      %s20 = sphi 0, %s24
      %p21 = scmp.ge.s32.totalorder %s20, 4
      %s27 = sphi 0, %s39
      %s28 = sphi 0, %s35
      %s29 = sphi 0, %s27
      %s30 = sphi 0, %s28
      %s31 = sphi 0, %s29
      %s32 = sphi 0, %s30
      %s46 = sphi 0, %s48
      %s49 = sphi 0, %s46
      %s50 = sphi 0, %s49
      %s66 = sphi 0, %s50
      %s70 = sphi 0, %s70
      %s72 = sphi 0, %s70
      %s73 = sphi 0, %s72
      %s87 = sphi 0, %s73
      %s91 = sphi 0, %s91
      %s93 = sphi 0, %s91
      %s94 = sphi 0, %s93
      %s108 = sphi 0, %s94
      %s112 = sphi 0, %s112
      %s114 = sphi 0, %s112
      %s115 = sphi 0, %s114
      %s129 = sphi 0, %s115
      %s133 = sphi 0, %s133
      %s135 = sphi 0, %s133
      %s136 = sphi 0, %s135
      %s150 = sphi 0, %s136
      %s154 = sphi 0, %s154
      %s156 = sphi 0, %s154
      %s157 = sphi 0, %s156
      %s171 = sphi 0, %s157
      %s175 = sphi 0, %s175
      %s177 = sphi 0, %s175
      %s178 = sphi 0, %s177
      %s192 = sphi 0, %s178
      %s200 = sphi 0, %s202
      %s203 = sphi 0, %s200
      %s204 = sphi 0, %s203
      %s220 = sphi 0, %s204
    $region4: #{tpu_custom_call.1} parent=1 // loop_header_branch
      %23 = sbr.rel (%p21) target = $region8
    $region5: #{tpu_custom_call.1} parent=1 // loop_body
      %s25 = ssub.s32 %s20, 1
      %s26 = ssub.s32 %s20, 2
      %s33 = sadd.s32 1, %s28
      %p34 = scmp.ge.s32.totalorder %s33, 1
      %s35 = scalar_select %p34, 0, %s33
      %s36 = sadd.s32 1, %s27
      %s37 = scalar_select %p34, %s36, %s27
      %p38 = scmp.ge.s32.totalorder %s37, 2
      %s39 = scalar_select %p38, 0, %s37
      %s40 = ssub.s32 1, %s27
      %s41 = smul.u32 %s28, %s40
      %s42 = ssub.s32 1, %s39
      %s43 = smul.u32 %s35, %s42
      %s44 = ssub.s32 %s41, %s43
      %p45 = scmp.eq.s32.totalorder %s44, 0
      %s47 = sadd.s32 %s46, 1
      %s48 = scalar_select %p45, %s46, %s47
      %p51 = pneg %p45
      %p52 = scmp.eq.s32.totalorder %s20, 1
      %p53 = por %p51, %p52
      %p54 = scmp.ne.s32.totalorder %s46, %s49
      %p55 = scmp.eq.s32.totalorder %s20, 0
      %p56 = por %p54, %p55
      %p57 = scmp.ne.s32.totalorder %s46, %s49
      %p58 = scmp.eq.s32.totalorder %s25, 1
      %p59 = por %p57, %p58
      %p60 = scmp.ne.s32.totalorder %s49, %s50
      %p61 = scmp.eq.s32.totalorder %s25, 0
      %p62 = por %p60, %p61
      %p63 = scmp.ne.s32.totalorder %s49, %s50
      %p64 = scmp.eq.s32.totalorder %s26, 1
      %p65 = por %p63, %p64
      %p67 = scmp.ne.s32.totalorder %s50, %s66
      %p68 = scmp.eq.s32.totalorder %s26, 0
      %p69 = por %p67, %p68
      %s71 = sadd.s32 %s70, 1
      %p74 = scmp.eq.s32.totalorder %s20, 1
      %p75 = scmp.ne.s32.totalorder %s70, %s72
      %p76 = scmp.eq.s32.totalorder %s20, 0
      %p77 = por %p75, %p76
      %p78 = scmp.ne.s32.totalorder %s70, %s72
      %p79 = scmp.eq.s32.totalorder %s25, 1
      %p80 = por %p78, %p79
      %p81 = scmp.ne.s32.totalorder %s72, %s73
      %p82 = scmp.eq.s32.totalorder %s25, 0
      %p83 = por %p81, %p82
      %p84 = scmp.ne.s32.totalorder %s72, %s73
      %p85 = scmp.eq.s32.totalorder %s26, 1
      %p86 = por %p84, %p85
      %p88 = scmp.ne.s32.totalorder %s73, %s87
      %p89 = scmp.eq.s32.totalorder %s26, 0
      %p90 = por %p88, %p89
      %s92 = sadd.s32 %s91, 1
      %p95 = scmp.eq.s32.totalorder %s20, 1
      %p96 = scmp.ne.s32.totalorder %s91, %s93
      %p97 = scmp.eq.s32.totalorder %s20, 0
      %p98 = por %p96, %p97
      %p99 = scmp.ne.s32.totalorder %s91, %s93
      %p100 = scmp.eq.s32.totalorder %s25, 1
      %p101 = por %p99, %p100
      %p102 = scmp.ne.s32.totalorder %s93, %s94
      %p103 = scmp.eq.s32.totalorder %s25, 0
      %p104 = por %p102, %p103
      %p105 = scmp.ne.s32.totalorder %s93, %s94
      %p106 = scmp.eq.s32.totalorder %s26, 1
      %p107 = por %p105, %p106
      %p109 = scmp.ne.s32.totalorder %s94, %s108
      %p110 = scmp.eq.s32.totalorder %s26, 0
      %p111 = por %p109, %p110
      %s113 = sadd.s32 %s112, 1
      %p116 = scmp.eq.s32.totalorder %s20, 1
      %p117 = scmp.ne.s32.totalorder %s112, %s114
      %p118 = scmp.eq.s32.totalorder %s20, 0
      %p119 = por %p117, %p118
      %p120 = scmp.ne.s32.totalorder %s112, %s114
      %p121 = scmp.eq.s32.totalorder %s25, 1
      %p122 = por %p120, %p121
      %p123 = scmp.ne.s32.totalorder %s114, %s115
      %p124 = scmp.eq.s32.totalorder %s25, 0
      %p125 = por %p123, %p124
      %p126 = scmp.ne.s32.totalorder %s114, %s115
      %p127 = scmp.eq.s32.totalorder %s26, 1
      %p128 = por %p126, %p127
      %p130 = scmp.ne.s32.totalorder %s115, %s129
      %p131 = scmp.eq.s32.totalorder %s26, 0
      %p132 = por %p130, %p131
      %s134 = sadd.s32 %s133, 1
      %p137 = scmp.eq.s32.totalorder %s20, 1
      %p138 = scmp.ne.s32.totalorder %s133, %s135
      %p139 = scmp.eq.s32.totalorder %s20, 0
      %p140 = por %p138, %p139
      %p141 = scmp.ne.s32.totalorder %s133, %s135
      %p142 = scmp.eq.s32.totalorder %s25, 1
      %p143 = por %p141, %p142
      %p144 = scmp.ne.s32.totalorder %s135, %s136
      %p145 = scmp.eq.s32.totalorder %s25, 0
      %p146 = por %p144, %p145
      %p147 = scmp.ne.s32.totalorder %s135, %s136
      %p148 = scmp.eq.s32.totalorder %s26, 1
      %p149 = por %p147, %p148
      %p151 = scmp.ne.s32.totalorder %s136, %s150
      %p152 = scmp.eq.s32.totalorder %s26, 0
      %p153 = por %p151, %p152
      %s155 = sadd.s32 %s154, 1
      %p158 = scmp.eq.s32.totalorder %s20, 1
      %p159 = scmp.ne.s32.totalorder %s154, %s156
      %p160 = scmp.eq.s32.totalorder %s20, 0
      %p161 = por %p159, %p160
      %p162 = scmp.ne.s32.totalorder %s154, %s156
      %p163 = scmp.eq.s32.totalorder %s25, 1
      %p164 = por %p162, %p163
      %p165 = scmp.ne.s32.totalorder %s156, %s157
      %p166 = scmp.eq.s32.totalorder %s25, 0
      %p167 = por %p165, %p166
      %p168 = scmp.ne.s32.totalorder %s156, %s157
      %p169 = scmp.eq.s32.totalorder %s26, 1
      %p170 = por %p168, %p169
      %p172 = scmp.ne.s32.totalorder %s157, %s171
      %p173 = scmp.eq.s32.totalorder %s26, 0
      %p174 = por %p172, %p173
      %s176 = sadd.s32 %s175, 1
      %p179 = scmp.eq.s32.totalorder %s20, 1
      %p180 = scmp.ne.s32.totalorder %s175, %s177
      %p181 = scmp.eq.s32.totalorder %s20, 0
      %p182 = por %p180, %p181
      %p183 = scmp.ne.s32.totalorder %s175, %s177
      %p184 = scmp.eq.s32.totalorder %s25, 1
      %p185 = por %p183, %p184
      %p186 = scmp.ne.s32.totalorder %s177, %s178
      %p187 = scmp.eq.s32.totalorder %s25, 0
      %p188 = por %p186, %p187
      %p189 = scmp.ne.s32.totalorder %s177, %s178
      %p190 = scmp.eq.s32.totalorder %s26, 1
      %p191 = por %p189, %p190
      %p193 = scmp.ne.s32.totalorder %s178, %s192
      %p194 = scmp.eq.s32.totalorder %s26, 0
      %p195 = por %p193, %p194
      %s196 = smul.u32 %s28, %s27
      %s197 = smul.u32 %s35, %s39
      %s198 = ssub.s32 %s196, %s197
      %p199 = scmp.eq.s32.totalorder %s198, 0
      %s201 = sadd.s32 %s200, 1
      %s202 = scalar_select %p199, %s200, %s201
      %p205 = pneg %p199
      %p206 = scmp.eq.s32.totalorder %s20, 1
      %p207 = por %p205, %p206
      %p208 = scmp.ne.s32.totalorder %s200, %s203
      %p209 = scmp.eq.s32.totalorder %s20, 0
      %p210 = por %p208, %p209
      %p211 = scmp.ne.s32.totalorder %s200, %s203
      %p212 = scmp.eq.s32.totalorder %s25, 1
      %p213 = por %p211, %p212
      %p214 = scmp.ne.s32.totalorder %s203, %s204
      %p215 = scmp.eq.s32.totalorder %s25, 0
      %p216 = por %p214, %p215
      %p217 = scmp.ne.s32.totalorder %s203, %s204
      %p218 = scmp.eq.s32.totalorder %s26, 1
      %p219 = por %p217, %p218
      %p221 = scmp.ne.s32.totalorder %s204, %s220
      %p222 = scmp.eq.s32.totalorder %s26, 0
      %p223 = por %p221, %p222
      %p224 = scmp.le.s32.totalorder 1, %s20
      %p225 = scmp.lt.s32.totalorder %s20, 3
      %p226 = pnand %p224, %p225
      %p227 = pneg %p226
      // Predicated region
      $region9: #{tpu_custom_call.1} parent=5 // pred_check
        _
      $region10: #{tpu_custom_call.1} parent=5 // pred_check_branch
        %229 = sbr.rel (%p226) target = $region12
      $region11: #{tpu_custom_call.1} parent=5 // pred_region
        %s230 = ssub.s32 %s20, 1
        // Predicated region
        $region13: #{tpu_custom_call.1} parent=11 // pred_check
          %p231 = pneg %p83
        $region14: #{tpu_custom_call.1} parent=11 // pred_check_branch
          %233 = sbr.rel (%p231) target = $region16
        $region15: #{tpu_custom_call.1} parent=11 // pred_region
          %235 = vsyncadd [#allocation9], 0
          %s236 = sshll.u32 %s1, 4
          %s237 = int_to_ptr.hbm [resolvable:$true] %s236
          %s238 = sshll.u32 [#allocation8], 4
          %s239 = int_to_ptr.vmem [resolvable:$true] %s238
          %244 = dma.hbm_to_vmem [thread:$0]  %s237, 1024, %s239, [#allocation9], 64, 64, 4
        $region16: #{tpu_custom_call.1} parent=11 // pred_fallthru
          _
        // Predicated region
        $region17: #{tpu_custom_call.1} parent=11 // pred_check
          %p245 = pneg %p104
        $region18: #{tpu_custom_call.1} parent=11 // pred_check_branch
          %247 = sbr.rel (%p245) target = $region20
        $region19: #{tpu_custom_call.1} parent=11 // pred_region
          _
        $region20: #{tpu_custom_call.1} parent=11 // pred_fallthru
          _
        // Predicated region
        $region21: #{tpu_custom_call.1} parent=11 // pred_check
          %p248 = pneg %p125
        $region22: #{tpu_custom_call.1} parent=11 // pred_check_branch
          %250 = sbr.rel (%p248) target = $region24
        $region23: #{tpu_custom_call.1} parent=11 // pred_region
          _
        $region24: #{tpu_custom_call.1} parent=11 // pred_fallthru
          _
        // Predicated region
        $region25: #{tpu_custom_call.1} parent=11 // pred_check
          %p251 = pneg %p146
        $region26: #{tpu_custom_call.1} parent=11 // pred_check_branch
          %253 = sbr.rel (%p251) target = $region28
        $region27: #{tpu_custom_call.1} parent=11 // pred_region
          _
        $region28: #{tpu_custom_call.1} parent=11 // pred_fallthru
          _
        // Predicated region
        $region29: #{tpu_custom_call.1} parent=11 // pred_check
          %p254 = pneg %p167
        $region30: #{tpu_custom_call.1} parent=11 // pred_check_branch
          %256 = sbr.rel (%p254) target = $region32
        $region31: #{tpu_custom_call.1} parent=11 // pred_region
          %258 = vsyncadd [#allocation9], 0
          %s259 = sshll.u32 %s5, 4
          %s260 = int_to_ptr.hbm [resolvable:$true] %s259
          %s261 = sshll.u32 [#allocation10], 4
          %s262 = int_to_ptr.vmem [resolvable:$true] %s261
          %267 = dma.hbm_to_vmem [thread:$0]  %s260, 1024, %s262, [#allocation9], 64, 64, 4
        $region32: #{tpu_custom_call.1} parent=11 // pred_fallthru
          _
        // Predicated region
        $region33: #{tpu_custom_call.1} parent=11 // pred_check
          %p268 = pneg %p188
        $region34: #{tpu_custom_call.1} parent=11 // pred_check_branch
          %270 = sbr.rel (%p268) target = $region36
        $region35: #{tpu_custom_call.1} parent=11 // pred_region
          _
        $region36: #{tpu_custom_call.1} parent=11 // pred_fallthru
          _
      $region12: #{tpu_custom_call.1} parent=5 // pred_fallthru
        _
      %p271 = scmp.lt.s32.totalorder %s20, 2
      // Predicated region
      $region37: #{tpu_custom_call.1} parent=5 // pred_check
        %p272 = pneg %p271
      $region38: #{tpu_custom_call.1} parent=5 // pred_check_branch
        %274 = sbr.rel (%p272) target = $region40
      $region39: #{tpu_custom_call.1} parent=5 // pred_region
        // Predicated region
        $region41: #{tpu_custom_call.1} parent=39 // pred_check
          %p275 = pneg %p56
        $region42: #{tpu_custom_call.1} parent=39 // pred_check_branch
          %277 = sbr.rel (%p275) target = $region44
        $region43: #{tpu_custom_call.1} parent=39 // pred_region
          %s278 = sand.u32 %s46, 1
          %s279 = scalar_lea.sflag [#allocation6], %s278
          %s280 = sand.u32 %s46, 1
          %s281 = smul.addr %s280, 16
          %s282 = scalar_lea.vmem [#allocation5], %s281
          %s283 = ssub.s32 1, %s27
          %s284 = smul.u32 %s28, %s283
          %s285 = smul.u32 2, %s284
          %287 = vsyncadd %s279, 0
          %s288 = smul.addr %s285, 8
          %s289 = scalar_lea.hbm %s0, %s288
          %s290 = sshll.u32 %s289, 4
          %s291 = int_to_ptr.hbm [resolvable:$true] %s290
          %s292 = sshll.u32 %s282, 4
          %s293 = int_to_ptr.vmem [resolvable:$true] %s292
          %298 = dma.hbm_to_vmem [thread:$0]  %s291, 256, %s293, %s279, 128, 128, 8
        $region44: #{tpu_custom_call.1} parent=39 // pred_fallthru
          _
      $region40: #{tpu_custom_call.1} parent=5 // pred_fallthru
        _
      %p299 = scmp.le.s32.totalorder 1, %s20
      %p300 = scmp.lt.s32.totalorder %s20, 3
      %p301 = pnand %p299, %p300
      %p302 = pneg %p301
      // Predicated region
      $region45: #{tpu_custom_call.1} parent=5 // pred_check
        _
      $region46: #{tpu_custom_call.1} parent=5 // pred_check_branch
        %304 = sbr.rel (%p301) target = $region48
      $region47: #{tpu_custom_call.1} parent=5 // pred_region
        %s305 = ssub.s32 %s20, 1
        %s306 = sand.u32 %s49, 1
        %s307 = scalar_lea.sflag [#allocation6], %s306
        %s308 = sand.u32 %s49, 1
        %s309 = smul.addr %s308, 16
        %s310 = scalar_lea.vmem [#allocation5], %s309
        // Predicated region
        $region49: #{tpu_custom_call.1} parent=47 // pred_check
          %p311 = pneg %p62
        $region50: #{tpu_custom_call.1} parent=47 // pred_check_branch
          %313 = sbr.rel (%p311) target = $region52
        $region51: #{tpu_custom_call.1} parent=47 // pred_region
          %315 = dma.done %s307, 256
        $region52: #{tpu_custom_call.1} parent=47 // pred_fallthru
          _
        // Predicated region
        $region53: #{tpu_custom_call.1} parent=47 // pred_check
          %p316 = pneg %p83
        $region54: #{tpu_custom_call.1} parent=47 // pred_check_branch
          %318 = sbr.rel (%p316) target = $region56
        $region55: #{tpu_custom_call.1} parent=47 // pred_region
          %320 = dma.done [#allocation9], 1024
        $region56: #{tpu_custom_call.1} parent=47 // pred_fallthru
          _
        // Predicated region
        $region57: #{tpu_custom_call.1} parent=47 // pred_check
          %p321 = pneg %p167
        $region58: #{tpu_custom_call.1} parent=47 // pred_check_branch
          %323 = sbr.rel (%p321) target = $region60
        $region59: #{tpu_custom_call.1} parent=47 // pred_region
          %325 = dma.done [#allocation9], 1024
        $region60: #{tpu_custom_call.1} parent=47 // pred_fallthru
          _
        %s326 = sand.u32 %s49, 1
        %s327 = scalar_lea.sflag [#allocation6], %s326
        %s328 = sand.u32 %s49, 1
        %s329 = smul.addr %s328, 16
        %s330 = scalar_lea.vmem [#allocation5], %s329
        %p331 = pneg %p62
        %p332 = pneg %p59
        %p333 = pneg %p83
        %p334 = pneg %p80
        %p335 = pneg %p104
        %p336 = pneg %p101
        %p337 = pneg %p125
        %p338 = pneg %p122
        %p339 = pneg %p146
        %p340 = pneg %p143
        %p341 = pneg %p167
        %p342 = pneg %p164
        %p343 = pneg %p188
        %p344 = pneg %p185
        %p345 = pneg %p216
        %p346 = pneg %p213
        %s347 = sand.u32 %s203, 1
        %s348 = scalar_lea.sflag [#allocation7], %s347
        %s349 = sand.u32 %s203, 1
        %s350 = smul.addr %s349, 16
        %s351 = scalar_lea.vmem [#allocation11], %s350
        %s352 = ssub.s32 1, %s29
        %s353 = smul.u32 %s30, %s352
        %s354 = smul.u32 2, %s353
        %s355 = smul.u32 %s30, %s29
        %s356 = smul.u32 2, %s355
        %p357 = scmp.eq.s32.totalorder %s29, 0
        // Predicated region
        $region61: #{tpu_custom_call.1} parent=47 // pred_check
          %p358 = pneg %p357
        $region62: #{tpu_custom_call.1} parent=47 // pred_check_branch
          %360 = sbr.rel (%p358) target = $region64
        $region63: #{tpu_custom_call.1} parent=47 // pred_region
          %p361 = scmp.eq.s32.totalorder %s30, 0
          // Predicated region
          $region65: #{tpu_custom_call.1} parent=63 // pred_check
            %p362 = pneg %p361
          $region66: #{tpu_custom_call.1} parent=63 // pred_check_branch
            %364 = sbr.rel (%p362) target = $region68
          $region67: #{tpu_custom_call.1} parent=63 // pred_region
            %365 = vst [vmem:[#allocation2] sm:$0x1] 0.0
            %366 = vst [vmem:[#allocation3] sm:$0x1] 0.0
          $region68: #{tpu_custom_call.1} parent=63 // pred_fallthru
            _
          %v367 = vld [vmem:[%s310] sm:$0xff]
          %v368 = vld [vmem:[%s310 + $0x8] sm:$0xff]
          %v369 = vpack.c.bf16 %v368, %v367
          %v370 = vld [vmem:[#allocation8] sm:$0xf]
          %v371 = vld [vmem:[#allocation8 + $0x4] sm:$0xf]
          %v372 = vld [vmem:[#allocation8 + $0x8] sm:$0xf]
          %v373 = vld [vmem:[#allocation8 + $0xc] sm:$0xf]
          %v374 = vld [vmem:[#allocation8 + $0x10] sm:$0xf]
          %v375 = vld [vmem:[#allocation8 + $0x14] sm:$0xf]
          %v376 = vld [vmem:[#allocation8 + $0x18] sm:$0xf]
          %v377 = vld [vmem:[#allocation8 + $0x1c] sm:$0xf]
          %v378 = vld [vmem:[#allocation8 + $0x20] sm:$0xf]
          %v379 = vld [vmem:[#allocation8 + $0x24] sm:$0xf]
          %v380 = vld [vmem:[#allocation8 + $0x28] sm:$0xf]
          %v381 = vld [vmem:[#allocation8 + $0x2c] sm:$0xf]
          %v382 = vld [vmem:[#allocation8 + $0x30] sm:$0xf]
          %v383 = vld [vmem:[#allocation8 + $0x34] sm:$0xf]
          %v384 = vld [vmem:[#allocation8 + $0x38] sm:$0xf]
          %v385 = vld [vmem:[#allocation8 + $0x3c] sm:$0xf]
          %v402 = vunpack.c.l.b16 %v370
          %v403 = vunpack.c.l.b16 %v371
          %v404 = vunpack.c.l.b16 %v372
          %v405 = vunpack.c.l.b16 %v373
          %v406 = vunpack.c.l.b16 %v374
          %v407 = vunpack.c.l.b16 %v375
          %v408 = vunpack.c.l.b16 %v376
          %v409 = vunpack.c.l.b16 %v377
          %v410 = vunpack.c.l.b16 %v378
          %v411 = vunpack.c.l.b16 %v379
          %v412 = vunpack.c.l.b16 %v380
          %v413 = vunpack.c.l.b16 %v381
          %v414 = vunpack.c.l.b16 %v382
          %v415 = vunpack.c.l.b16 %v383
          %v416 = vunpack.c.l.b16 %v384
          %v417 = vunpack.c.l.b16 %v385
          %v418 = vpack.c.b16 %v403, %v402
          %v419 = vpack.c.b16 %v405, %v404
          %v420 = vpack.c.b16 %v407, %v406
          %v421 = vpack.c.b16 %v409, %v408
          %v422 = vpack.c.b16 %v411, %v410
          %v423 = vpack.c.b16 %v413, %v412
          %v424 = vpack.c.b16 %v415, %v414
          %v425 = vpack.c.b16 %v417, %v416
          %434 = vmatpush.bf16.msra.mxu0 %v425
          %435 = vmatpush.bf16.msra.mxu0 %v424
          %436 = vmatpush.bf16.msra.mxu0 %v423
          %437 = vmatpush.bf16.msra.mxu0 %v422
          %438 = vmatpush.bf16.msra.mxu0 %v421
          %439 = vmatpush.bf16.msra.mxu0 %v420
          %440 = vmatpush.bf16.msra.mxu0 %v419
          %441 = vmatpush.bf16.msra.mxu0 %v418
          %442 = vmatmul.bf16.gmra.mxu0 %v369
          %v443 = vpop.f32.mrf.mxu0
          %v444 = vadd.f32 0.0, %v443
          %v445 = vpop.f32.mrf.mxu0
          %v446 = vadd.f32 0.0, %v445
          %447 = vdwg.mxu0
          %v448 = vld [vmem:[#allocation2] sm:$0x1]
          %v449 = vadd.f32 %v444, %v446
          %v450 = vrot.slane %v449, 4
          %v451 = vadd.f32 %v449, %v450
          %v452 = vrot.slane %v451, 2
          %v453 = vadd.f32 %v451, %v452
          %v454 = vrot.slane %v453, 1
          %v455 = vadd.f32 %v453, %v454
          %v456 = vadd.f32 %v448, %v455
          %457 = vst [vmem:[#allocation2] sm:$0x1] %v456
          %v458 = vld [vmem:[#allocation3] sm:$0x1]
          %v459 = vmul.f32 %v444, %v444
          %v460 = vmul.f32 %v446, %v446
          %v461 = vadd.f32 %v459, %v460
          %v462 = vrot.slane %v461, 4
          %v463 = vadd.f32 %v461, %v462
          %v464 = vrot.slane %v463, 2
          %v465 = vadd.f32 %v463, %v464
          %v466 = vrot.slane %v465, 1
          %v467 = vadd.f32 %v465, %v466
          %v468 = vadd.f32 %v458, %v467
          %469 = vst [vmem:[#allocation3] sm:$0x1] %v468
          %v470 = vld [vmem:[%s2] sm:$0x1]
          %v472 = vperm.slane %v470, 0
          %v474 = vadd.f32 %v444, %v472
          %v475 = vadd.f32 %v446, %v472
          %s476 = smul.u32 %s30, 16
          %s477 = scalar_lea.vmem [#allocation4], %s476
          %478 = vst [vmem:[%s477] sm:$0xff] %v474
          %479 = vst [vmem:[%s477 + $0x8] sm:$0xff] %v475
        $region64: #{tpu_custom_call.1} parent=47 // pred_fallthru
          _
        %p480 = scmp.eq.s32.totalorder %s29, 1
        // Predicated region
        $region69: #{tpu_custom_call.1} parent=47 // pred_check
          %p481 = pneg %p480
        $region70: #{tpu_custom_call.1} parent=47 // pred_check_branch
          %483 = sbr.rel (%p481) target = $region72
        $region71: #{tpu_custom_call.1} parent=47 // pred_region
          %p484 = scmp.eq.s32.totalorder %s30, 0
          // Predicated region
          $region73: #{tpu_custom_call.1} parent=71 // pred_check
            %p485 = pneg %p484
          $region74: #{tpu_custom_call.1} parent=71 // pred_check_branch
            %487 = sbr.rel (%p485) target = $region76
          $region75: #{tpu_custom_call.1} parent=71 // pred_region
            %v488 = vld [vmem:[#allocation2] sm:$0x1]
            %v489 = vmul.f32 %v488, 0.125
            %v490 = vld [vmem:[#allocation3] sm:$0x1]
            %v491 = vmul.f32 %v490, 0.125
            %v492 = vmul.f32 %v489, %v489
            %v493 = vsub.f32 %v491, %v492
            %v494 = vmax.f32 %v493, 0.0
            %v495 = vld [vmem:[%s3] sm:$0x1]
            %v496 = vadd.f32 %v494, 1e-05
            %v497 = vrsqrt.pop %v496
            %v498 = vmul.f32 %v497, %v496
            %v499 = vmul.f32 %v498, %v497
            %v500 = vmul.f32 0.5, %v499
            %v501 = vsub.f32 1.5, %v500
            %v502 = vmul.f32 %v497, %v501
            %vm503 = vweird.f32 %v496
            %vm504 = vweird.f32 %v497
            %vm505 = vmor %vm503, %vm504
            %v506 = vsel %vm505, %v497, %v502
            %v507 = vmul.f32 %v495, %v506
            %508 = vst [vmem:[#allocation2] sm:$0x1] %v507
            %v509 = vld [vmem:[%s4] sm:$0x1]
            %v510 = vld [vmem:[%s2] sm:$0x1]
            %v511 = vadd.f32 %v489, %v510
            %v512 = vmul.f32 %v511, %v507
            %v513 = vsub.f32 %v509, %v512
            %514 = vst [vmem:[#allocation3] sm:$0x1] %v513
          $region76: #{tpu_custom_call.1} parent=71 // pred_fallthru
            _
          %s515 = smul.u32 %s30, 16
          %s516 = scalar_lea.vmem [#allocation4], %s515
          %v517 = vld [vmem:[%s516] sm:$0xff]
          %v518 = vld [vmem:[%s516 + $0x8] sm:$0xff]
          %v519 = vld [vmem:[#allocation2] sm:$0x1]
          %v521 = vperm.slane %v519, 0
          %v523 = vmul.f32 %v517, %v521
          %v524 = vmul.f32 %v518, %v521
          %v525 = vld [vmem:[#allocation3] sm:$0x1]
          %v527 = vperm.slane %v525, 0
          %v529 = vadd.f32 %v523, %v527
          %v530 = vadd.f32 %v524, %v527
          %v531 = vmax.f32 %v529, 0.0
          %v532 = vmax.f32 %v530, 0.0
          %v533 = vpack.c.bf16 %v532, %v531
          %v534 = vld [vmem:[#allocation10] sm:$0xf]
          %v535 = vld [vmem:[#allocation10 + $0x4] sm:$0xf]
          %v536 = vld [vmem:[#allocation10 + $0x8] sm:$0xf]
          %v537 = vld [vmem:[#allocation10 + $0xc] sm:$0xf]
          %v538 = vld [vmem:[#allocation10 + $0x10] sm:$0xf]
          %v539 = vld [vmem:[#allocation10 + $0x14] sm:$0xf]
          %v540 = vld [vmem:[#allocation10 + $0x18] sm:$0xf]
          %v541 = vld [vmem:[#allocation10 + $0x1c] sm:$0xf]
          %v542 = vld [vmem:[#allocation10 + $0x20] sm:$0xf]
          %v543 = vld [vmem:[#allocation10 + $0x24] sm:$0xf]
          %v544 = vld [vmem:[#allocation10 + $0x28] sm:$0xf]
          %v545 = vld [vmem:[#allocation10 + $0x2c] sm:$0xf]
          %v546 = vld [vmem:[#allocation10 + $0x30] sm:$0xf]
          %v547 = vld [vmem:[#allocation10 + $0x34] sm:$0xf]
          %v548 = vld [vmem:[#allocation10 + $0x38] sm:$0xf]
          %v549 = vld [vmem:[#allocation10 + $0x3c] sm:$0xf]
          %v550 = vld [vmem:[%s6] sm:$0x1]
          %v552 = vperm.slane %v550, 0
          %v570 = vunpack.c.l.b16 %v534
          %v571 = vunpack.c.l.b16 %v535
          %v572 = vunpack.c.l.b16 %v536
          %v573 = vunpack.c.l.b16 %v537
          %v574 = vunpack.c.l.b16 %v538
          %v575 = vunpack.c.l.b16 %v539
          %v576 = vunpack.c.l.b16 %v540
          %v577 = vunpack.c.l.b16 %v541
          %v578 = vunpack.c.l.b16 %v542
          %v579 = vunpack.c.l.b16 %v543
          %v580 = vunpack.c.l.b16 %v544
          %v581 = vunpack.c.l.b16 %v545
          %v582 = vunpack.c.l.b16 %v546
          %v583 = vunpack.c.l.b16 %v547
          %v584 = vunpack.c.l.b16 %v548
          %v585 = vunpack.c.l.b16 %v549
          %v586 = vpack.c.b16 %v571, %v570
          %v587 = vpack.c.b16 %v573, %v572
          %v588 = vpack.c.b16 %v575, %v574
          %v589 = vpack.c.b16 %v577, %v576
          %v590 = vpack.c.b16 %v579, %v578
          %v591 = vpack.c.b16 %v581, %v580
          %v592 = vpack.c.b16 %v583, %v582
          %v593 = vpack.c.b16 %v585, %v584
          %602 = vmatpush.bf16.msra.mxu0 %v593
          %603 = vmatpush.bf16.msra.mxu0 %v592
          %604 = vmatpush.bf16.msra.mxu0 %v591
          %605 = vmatpush.bf16.msra.mxu0 %v590
          %606 = vmatpush.bf16.msra.mxu0 %v589
          %607 = vmatpush.bf16.msra.mxu0 %v588
          %608 = vmatpush.bf16.msra.mxu0 %v587
          %609 = vmatpush.bf16.msra.mxu0 %v586
          %610 = vmatmul.bf16.gmra.mxu0 %v533
          %v611 = vpop.f32.mrf.mxu0
          %v612 = vadd.f32 %v552, %v611
          %v613 = vpop.f32.mrf.mxu0
          %v614 = vadd.f32 %v552, %v613
          %615 = vdwg.mxu0
          %616 = vst [vmem:[%s351] sm:$0xff] %v612
          %617 = vst [vmem:[%s351 + $0x8] sm:$0xff] %v614
        $region72: #{tpu_custom_call.1} parent=47 // pred_fallthru
          _
        %s618 = sand.u32 %s203, 1
        %s619 = scalar_lea.sflag [#allocation7], %s618
        %s620 = sand.u32 %s203, 1
        %s621 = smul.addr %s620, 16
        %s622 = scalar_lea.vmem [#allocation11], %s621
        // Predicated region
        $region77: #{tpu_custom_call.1} parent=47 // pred_check
          %p623 = pneg %p213
        $region78: #{tpu_custom_call.1} parent=47 // pred_check_branch
          %625 = sbr.rel (%p623) target = $region80
        $region79: #{tpu_custom_call.1} parent=47 // pred_region
          %s626 = smul.u32 %s30, %s29
          %s627 = smul.u32 2, %s626
          %629 = vsyncadd %s619, 0
          %s630 = smul.addr %s627, 8
          %s631 = scalar_lea.hbm %s7, %s630
          %s632 = sshll.u32 %s622, 4
          %s633 = int_to_ptr.vmem [resolvable:$true] %s632
          %s634 = sshll.u32 %s631, 4
          %s635 = int_to_ptr.hbm [resolvable:$true] %s634
          %640 = dma.vmem_to_hbm [thread:$0]  %s633, 256, %s635, %s619, 128, 128, 8
        $region80: #{tpu_custom_call.1} parent=47 // pred_fallthru
          _
      $region48: #{tpu_custom_call.1} parent=5 // pred_fallthru
        _
      %p641 = scmp.le.s32.totalorder 2, %s20
      // Predicated region
      $region81: #{tpu_custom_call.1} parent=5 // pred_check
        %p642 = pneg %p641
      $region82: #{tpu_custom_call.1} parent=5 // pred_check_branch
        %644 = sbr.rel (%p642) target = $region84
      $region83: #{tpu_custom_call.1} parent=5 // pred_region
        %s645 = ssub.s32 %s20, 2
        // Predicated region
        $region85: #{tpu_custom_call.1} parent=83 // pred_check
          %p646 = pneg %p219
        $region86: #{tpu_custom_call.1} parent=83 // pred_check_branch
          %648 = sbr.rel (%p646) target = $region88
        $region87: #{tpu_custom_call.1} parent=83 // pred_region
          %s649 = sand.u32 %s204, 1
          %s650 = scalar_lea.sflag [#allocation7], %s649
          %s651 = sand.u32 %s204, 1
          %s652 = smul.addr %s651, 16
          %s653 = scalar_lea.vmem [#allocation11], %s652
          %655 = dma.done %s650, 256
        $region88: #{tpu_custom_call.1} parent=83 // pred_fallthru
          _
      $region84: #{tpu_custom_call.1} parent=5 // pred_fallthru
        _
    $region6: #{tpu_custom_call.1} parent=1 // loop_footer
      %s24 = sadd.s32 1, %s20
    $region7: #{tpu_custom_call.1} parent=1 // loop_footer_branch
      %19 = sbr.rel target = $region3
    $region8: #{tpu_custom_call.1} parent=1 // loop_exit
      _
    %656 = vsyncpa [#allocation6], 1
    %s657 = scalar_lea.sflag [#allocation6], 1
    %658 = vsyncpa %s657, 1
    %659 = vsyncpa [#allocation9], 1
    %660 = vsyncpa [#allocation7], 1
    %s661 = scalar_lea.sflag [#allocation7], 1
    %662 = vsyncpa %s661, 1

</llo_original>
